<compile_context>
chip_gen: v6e
topology: v6e:2x2x1
jax: 0.10.0
libtpu: 0.0.40
codegen_flags: <defaults>
</compile_context>

<pallas_src>
from functools import partial

import jax
import jax.numpy as jnp
import numpy as np
from jax import lax
from jax.experimental import pallas as pl
from jax.experimental.pallas import tpu as pltpu


# ----------------------------------------------------------------------------
# Pallas kernel: TG groups (TG*Mp "positions") per grid step.
# ----------------------------------------------------------------------------
def _group_encoder_kernel(x_ref,                    # (tg*Mp, F)   f32
                          w1_ref, t1_ref,           # conv1[0]+BN1 folded (f32, F small)
                          w1b_ref, b1b_ref,         # conv1[3]     (bf16 / f32 shift)
                          w2h_ref, w2g_ref, t2_ref,  # conv2[0]+BN2 folded, split halves
                          w2b_ref, b2b_ref,         # conv2[3]     (out padded to 128k)
                          out_ref,                  # (tg, out_pad) f32
                          *, valid_m):
    rows, F = x_ref.shape
    tg, out_pad = out_ref.shape
    Mp = rows // tg
    Hp = w1_ref.shape[1]
    C2p = w1b_ref.shape[1]
    C4p = w2h_ref.shape[1]

    x = x_ref[...]                                               # f32 (rows, F)

    # conv1[0] + BN1 (scale folded into weight, bias folded into shift) + ReLU.
    # K = F is tiny -> VPU broadcast-FMAs instead of wasting a full MXU K-tile.
    if F <= 8:
        w1 = w1_ref[...]
        h1 = x[:, 0:1] * w1[0:1, :] + t1_ref[...]
        for f in range(1, F):
            h1 = h1 + x[:, f:f + 1] * w1[f:f + 1, :]
    else:  # MXU fallback for large feat_dim
        h1 = jnp.dot(x.astype(jnp.bfloat16), w1_ref[...].astype(jnp.bfloat16),
                     preferred_element_type=jnp.float32) + t1_ref[...]
    h1 = jnp.maximum(h1, 0.0)                                    # (rows, Hp)

    # conv1[3]
    h = jnp.dot(h1.astype(jnp.bfloat16), w1b_ref[...],
                preferred_element_type=jnp.float32) + b1b_ref[...]   # (rows, C2p)

    # per-group global max over the (valid) M positions
    h3 = h.reshape(tg, Mp, C2p)
    if valid_m != Mp:
        pos = lax.broadcasted_iota(jnp.int32, (tg, Mp, 1), 1)
        h3 = jnp.where(pos < valid_m, h3, -jnp.inf)
    gm = jnp.max(h3, axis=1)                                     # (tg, C2p)

    # conv2[0] + BN2: the channel-concat with the broadcast global max is folded into
    # two matmuls; the per-group -> per-row broadcast of the global term is a sublane
    # broadcast (VPU/XLU), not an MXU matmul.
    z_loc = jnp.dot(h.astype(jnp.bfloat16), w2h_ref[...],
                    preferred_element_type=jnp.float32)          # (rows, C4p)
    z_grp = jnp.dot(gm.astype(jnp.bfloat16), w2g_ref[...],
                    preferred_element_type=jnp.float32)          # (tg,   C4p)
    z = z_loc.reshape(tg, Mp, C4p) + z_grp[:, None, :] + t2_ref[...]
    z = jnp.maximum(z, 0.0).reshape(rows, C4p)

    # conv2[3]
    o = jnp.dot(z.astype(jnp.bfloat16), w2b_ref[...],
                preferred_element_type=jnp.float32) + b2b_ref[...]   # (rows, out_pad)

    # final per-group max-pool over (valid) positions -> lane-dense (tg, out_pad) store
    o3 = o.reshape(tg, Mp, out_pad)
    if valid_m != Mp:
        pos = lax.broadcasted_iota(jnp.int32, (tg, Mp, 1), 1)
        o3 = jnp.where(pos < valid_m, o3, -jnp.inf)
    out_ref[...] = jnp.max(o3, axis=1)


def _choose_tg(Mp, N, c_per_row, row_target=1024, inter_budget_bytes=12 << 20):
    """Groups per grid step.

    ~row_target matmul rows per step (amortizes the ~600-cycle per-step overhead),
    capped so (a) live f32+bf16 intermediates stay within a VMEM budget (v7x: 64 MiB
    total, 32 MiB scoped default), (b) the parallel grid axis keeps >= ~8 steps when N
    allows (v7x megacore load balance), and rounded to a multiple of 8 (sublane-aligned
    output tile), never exceeding the padded group count.
    """
    tg = max(1, row_target // max(Mp, 1))
    # VMEM cap on live intermediates (~6 B/element per row: f32 value + bf16 copy).
    max_rows = max(Mp, inter_budget_bytes // max(1, 6 * c_per_row))
    tg = min(tg, max(1, max_rows // Mp))
    # keep the grid long enough for both v7x TensorCores
    tg = min(tg, max(1, -(-N // 8)))
    tg = max(8, (tg // 8) * 8)
    tg = min(tg, ((N + 7) // 8) * 8)
    # TODO(synk): for extremely large M (> ~512) the tg>=8 floor can exceed the VMEM
    # budget; such groups would need an intra-group split of the position axis.
    return tg


# ----------------------------------------------------------------------------
# Wrapper
# ----------------------------------------------------------------------------
@partial(jax.jit, static_argnames=("out_dim",))
def group_encoder_forward(groups, kernel_params, out_dim):
    B, G, M, F = groups.shape
    N = B * G
    (w1, t1, w1b, b1b, w2h, w2g, t2, w2b, b2b) = kernel_params
    Hp = w1.shape[1]
    C2p = w1b.shape[1]
    C4p = w2h.shape[1]
    out_pad = w2b.shape[1]

    Mp = ((M + 7) // 8) * 8
    tg = _choose_tg(Mp, N, Hp + C2p + C4p + out_pad)
    n_pad = pl.cdiv(N, tg) * tg

    # Faithful to PyTorch: straight reshape (no permute) to (B*G, F, M).  One fused XLA
    # pass then lays positions on sublanes / channels on lanes and pre-flattens so the
    # kernel does no input relayout.  Padded groups/positions are masked / discarded.
    x = groups.reshape(N, F, M)
    x = jnp.transpose(x, (0, 2, 1)).astype(jnp.float32)            # (N, M, F)
    x = jnp.pad(x, ((0, n_pad - N), (0, Mp - M), (0, 0)))
    x = x.reshape(n_pad * Mp, F)

    weights = (w1, t1, w1b, b1b, w2h, w2g, t2, w2b, b2b)

    # Constant operands: fetched once per step with a constant index map (never
    # re-fetched from HBM after the first iteration).
    def const_spec(a):
        nd = a.ndim
        return pl.BlockSpec(a.shape, lambda n, _nd=nd: (0,) * _nd)

    # Advisory cost estimate (MACs * 2).
    flops = int(n_pad * Mp * 2 * (F * Hp + Hp * C2p + C2p * C4p + C4p * out_pad)
                + n_pad * 2 * C2p * C4p)
    bytes_accessed = int(x.size * x.dtype.itemsize
                         + sum(int(w.size) * w.dtype.itemsize for w in weights)
                         + n_pad * out_pad * 4)

    out = pl.pallas_call(
        partial(_group_encoder_kernel, valid_m=M),
        out_shape=jax.ShapeDtypeStruct((n_pad, out_pad), jnp.float32),
        grid=(n_pad // tg,),
        in_specs=[pl.BlockSpec((tg * Mp, F), lambda n: (n, 0))]
                 + [const_spec(w) for w in weights],
        out_specs=pl.BlockSpec((tg, out_pad), lambda n: (n, 0)),
        compiler_params=pltpu.CompilerParams(
            dimension_semantics=("parallel",),
            vmem_limit_bytes=48 * 1024 * 1024),
        cost_estimate=pl.CostEstimate(flops=flops, transcendentals=0,
                                      bytes_accessed=bytes_accessed),
    )(x, *weights)

    return out[:N, :out_dim].reshape(B, G, out_dim)


# ----------------------------------------------------------------------------
# Deterministic parameter init (PyTorch Conv1d-style uniform; BN in eval mode)
# ----------------------------------------------------------------------------
def init_params(key, feat_dim, hidden_dim=128, out_dim=128):
    H = hidden_dim
    eps = 1e-5
    ks = jax.random.split(key, 16)

    def u(k, shape, fan_in):
        bound = 1.0 / np.sqrt(fan_in)
        return jax.random.uniform(k, shape, jnp.float32, -bound, bound)

    # conv weights (PyTorch layout: (out_ch, in_ch))
    w1a = u(ks[0], (H, feat_dim), feat_dim);      b1a = u(ks[1], (H,), feat_dim)
    w1b = u(ks[2], (2 * H, H), H);                b1b = u(ks[3], (2 * H,), H)
    w2a = u(ks[4], (4 * H, 4 * H), 4 * H);        b2a = u(ks[5], (4 * H,), 4 * H)
    w2b = u(ks[6], (out_dim, 4 * H), 4 * H);      b2b = u(ks[7], (out_dim,), 4 * H)

    # BatchNorm1d params (eval mode, folded to per-channel scale/shift)
    g1 = 1.0 + 0.1 * jax.random.normal(ks[8], (H,))
    be1 = 0.1 * jax.random.normal(ks[9], (H,))
    m1 = 0.1 * jax.random.normal(ks[10], (H,))
    v1 = jnp.abs(jax.random.normal(ks[11], (H,))) + 0.5
    g2 = 1.0 + 0.1 * jax.random.normal(ks[12], (4 * H,))
    be2 = 0.1 * jax.random.normal(ks[13], (4 * H,))
    m2 = 0.1 * jax.random.normal(ks[14], (4 * H,))
    v2 = jnp.abs(jax.random.normal(ks[15], (4 * H,))) + 0.5

    s1 = g1 / jnp.sqrt(v1 + eps); t1 = be1 - m1 * s1
    s2 = g2 / jnp.sqrt(v2 + eps); t2 = be2 - m2 * s2

    raw = (w1a, b1a, s1, t1, w1b, b1b, w2a, b2a, s2, t2, w2b, b2b)

    # Kernel-side params: transpose to (in, out); fold BN scale + conv bias into
    # weights / shifts; split conv2[0] into local / global-max halves; zero-pad all
    # channel dims to multiples of 128 (full-width MXU lanes, lane-dense stores).
    # Padding is inert: padded weights/biases/shifts are 0, so padded channels stay 0
    # through ReLU / max and contribute nothing downstream.
    def p128(n):
        return ((n + 127) // 128) * 128

    Hp, C2p, C4p, Op = p128(H), p128(2 * H), p128(4 * H), p128(out_dim)
    F = feat_dim
    bf = jnp.bfloat16

    w1_eff = jnp.zeros((F, Hp), jnp.float32).at[:, :H].set(w1a.T * s1[None, :])
    t1_eff = jnp.zeros((1, Hp), jnp.float32).at[:, :H].set((b1a * s1 + t1)[None, :])
    w1b_t = jnp.zeros((Hp, C2p), jnp.float32).at[:H, :2 * H].set(w1b.T)
    b1b_k = jnp.zeros((1, C2p), jnp.float32).at[:, :2 * H].set(b1b[None, :])
    w2a_t = w2a.T                                            # (4H_in, 4H_out)
    w2h_eff = jnp.zeros((C2p, C4p), jnp.float32).at[:2 * H, :4 * H].set(
        w2a_t[:2 * H] * s2[None, :])                         # multiplies local feats
    w2g_eff = jnp.zeros((C2p, C4p), jnp.float32).at[:2 * H, :4 * H].set(
        w2a_t[2 * H:] * s2[None, :])                         # multiplies global max
    t2_eff = jnp.zeros((1, C4p), jnp.float32).at[:, :4 * H].set((b2a * s2 + t2)[None, :])
    w2b_t = jnp.zeros((C4p, Op), jnp.float32).at[:4 * H, :out_dim].set(w2b.T)
    b2b_k = jnp.zeros((1, Op), jnp.float32).at[:, :out_dim].set(b2b[None, :])

    # w1/t1 stay f32 (conv1[0] runs on the VPU); MXU weights are bf16.
    kernel_params = (w1_eff, t1_eff,
                     w1b_t.astype(bf), b1b_k,
                     w2h_eff.astype(bf), w2g_eff.astype(bf), t2_eff,
                     w2b_t.astype(bf), b2b_k)
    return kernel_params, raw


# ----------------------------------------------------------------------------
# Pure-JAX reference mirroring the PyTorch forward exactly (f32)
# ----------------------------------------------------------------------------
def reference(groups, raw):
    (w1a, b1a, s1, t1, w1b, b1b, w2a, b2a, s2, t2, w2b, b2b) = raw
    B, G, M, F = groups.shape
    x = groups.reshape(B * G, F, M)                                   # (N, F, M)
    h = jnp.einsum('of,nfm->nom', w1a, x) + b1a[None, :, None]
    h = h * s1[None, :, None] + t1[None, :, None]
    h = jnp.maximum(h, 0.0)
    h = jnp.einsum('oh,nhm->nom', w1b, h) + b1b[None, :, None]        # (N, 2H, M)
    gm = jnp.max(h, axis=-1, keepdims=True)
    c = jnp.concatenate([h, jnp.broadcast_to(gm, h.shape)], axis=1)   # (N, 4H, M)
    z = jnp.einsum('oc,ncm->nom', w2a, c) + b2a[None, :, None]
    z = z * s2[None, :, None] + t2[None, :, None]
    z = jnp.maximum(z, 0.0)
    z = jnp.einsum('oc,ncm->nom', w2b, z) + b2b[None, :, None]
    z = jnp.max(z, axis=-1)
    return z.reshape(B, G, -1)


if __name__ == "__main__":
    B, G, M, F = 2, 4, 8, 4
    hidden_dim, out_dim = 32, 32

    key = jax.random.PRNGKey(0)
    k_x, k_p = jax.random.split(key)
    groups = jax.random.normal(k_x, (B, G, M, F), dtype=jnp.float32)

    kernel_params, raw_params = init_params(k_p, F, hidden_dim, out_dim)

    out = group_encoder_forward(groups, kernel_params, out_dim=out_dim)
    out = jax.block_until_ready(out)

    ref = jax.block_until_ready(reference(groups, raw_params))
    # Tolerance widened slightly vs. pure-f32 because matmul operands are bf16
    # (f32 accumulation); observed error is well inside this.
    np.testing.assert_allclose(np.asarray(out), np.asarray(ref), rtol=2e-2, atol=2e-2)

    print("KERNEL_OK")
</pallas_src>

<mosaic_0001>
module attributes {stable_mosaic.version = 11 : i64} {
  func.func @_group_encoder_kernel(%arg0: i32, %arg1: memref<64x4xf32, #tpu.memory_space<vmem>>, %arg2: memref<4x128xf32, #tpu.memory_space<vmem>>, %arg3: memref<1x128xf32, #tpu.memory_space<vmem>>, %arg4: memref<128x128xbf16, #tpu.memory_space<vmem>>, %arg5: memref<1x128xf32, #tpu.memory_space<vmem>>, %arg6: memref<128x128xbf16, #tpu.memory_space<vmem>>, %arg7: memref<128x128xbf16, #tpu.memory_space<vmem>>, %arg8: memref<1x128xf32, #tpu.memory_space<vmem>>, %arg9: memref<128x128xbf16, #tpu.memory_space<vmem>>, %arg10: memref<1x128xf32, #tpu.memory_space<vmem>>, %arg11: memref<8x128xf32, #tpu.memory_space<vmem>>) attributes {dimension_semantics = [#tpu.dimension_semantics<parallel>], iteration_bounds = array<i64: 1>, scalar_prefetch = 0 : i64, scratch_operands = 0 : i64, tpu.core_type = #tpu.core_type<tc>, window_params = [{transform_indices = @transform_0, window_bounds = array<i64: 64, 4>}, {pipeline_mode = #tpu.pipeline_mode<synchronous>, transform_indices = @transform_1, window_bounds = array<i64: 4, 128>}, {pipeline_mode = #tpu.pipeline_mode<synchronous>, transform_indices = @transform_2, window_bounds = array<i64: 1, 128>}, {pipeline_mode = #tpu.pipeline_mode<synchronous>, transform_indices = @transform_3, window_bounds = array<i64: 128, 128>}, {pipeline_mode = #tpu.pipeline_mode<synchronous>, transform_indices = @transform_4, window_bounds = array<i64: 1, 128>}, {pipeline_mode = #tpu.pipeline_mode<synchronous>, transform_indices = @transform_5, window_bounds = array<i64: 128, 128>}, {pipeline_mode = #tpu.pipeline_mode<synchronous>, transform_indices = @transform_6, window_bounds = array<i64: 128, 128>}, {pipeline_mode = #tpu.pipeline_mode<synchronous>, transform_indices = @transform_7, window_bounds = array<i64: 1, 128>}, {pipeline_mode = #tpu.pipeline_mode<synchronous>, transform_indices = @transform_8, window_bounds = array<i64: 128, 128>}, {pipeline_mode = #tpu.pipeline_mode<synchronous>, transform_indices = @transform_9, window_bounds = array<i64: 1, 128>}, {transform_indices = @transform_10, window_bounds = array<i64: 8, 128>}]} {
    %c0 = arith.constant 0 : index
    %c0_0 = arith.constant 0 : index
    %0 = vector.load %arg1[%c0, %c0_0] : memref<64x4xf32, #tpu.memory_space<vmem>>, vector<64x4xf32>
    %c0_1 = arith.constant 0 : index
    %c0_2 = arith.constant 0 : index
    %1 = vector.load %arg2[%c0_1, %c0_2] : memref<4x128xf32, #tpu.memory_space<vmem>>, vector<4x128xf32>
    %2 = vector.extract_strided_slice %0 {offsets = [0, 0], sizes = [64, 1], strides = [1, 1]} : vector<64x4xf32> to vector<64x1xf32>
    %3 = vector.extract_strided_slice %1 {offsets = [0, 0], sizes = [1, 128], strides = [1, 1]} : vector<4x128xf32> to vector<1x128xf32>
    %4 = vector.broadcast %2 : vector<64x1xf32> to vector<64x128xf32>
    %5 = vector.broadcast %3 : vector<1x128xf32> to vector<64x128xf32>
    %6 = arith.mulf %4, %5 : vector<64x128xf32>
    %c0_3 = arith.constant 0 : index
    %c0_4 = arith.constant 0 : index
    %7 = vector.load %arg3[%c0_3, %c0_4] : memref<1x128xf32, #tpu.memory_space<vmem>>, vector<1x128xf32>
    %8 = vector.broadcast %7 : vector<1x128xf32> to vector<64x128xf32>
    %9 = arith.addf %6, %8 : vector<64x128xf32>
    %10 = vector.extract_strided_slice %0 {offsets = [0, 1], sizes = [64, 1], strides = [1, 1]} : vector<64x4xf32> to vector<64x1xf32>
    %11 = vector.extract_strided_slice %1 {offsets = [1, 0], sizes = [1, 128], strides = [1, 1]} : vector<4x128xf32> to vector<1x128xf32>
    %12 = vector.broadcast %10 : vector<64x1xf32> to vector<64x128xf32>
    %13 = vector.broadcast %11 : vector<1x128xf32> to vector<64x128xf32>
    %14 = arith.mulf %12, %13 : vector<64x128xf32>
    %15 = arith.addf %9, %14 : vector<64x128xf32>
    %16 = vector.extract_strided_slice %0 {offsets = [0, 2], sizes = [64, 1], strides = [1, 1]} : vector<64x4xf32> to vector<64x1xf32>
    %17 = vector.extract_strided_slice %1 {offsets = [2, 0], sizes = [1, 128], strides = [1, 1]} : vector<4x128xf32> to vector<1x128xf32>
    %18 = vector.broadcast %16 : vector<64x1xf32> to vector<64x128xf32>
    %19 = vector.broadcast %17 : vector<1x128xf32> to vector<64x128xf32>
    %20 = arith.mulf %18, %19 : vector<64x128xf32>
    %21 = arith.addf %15, %20 : vector<64x128xf32>
    %22 = vector.extract_strided_slice %0 {offsets = [0, 3], sizes = [64, 1], strides = [1, 1]} : vector<64x4xf32> to vector<64x1xf32>
    %23 = vector.extract_strided_slice %1 {offsets = [3, 0], sizes = [1, 128], strides = [1, 1]} : vector<4x128xf32> to vector<1x128xf32>
    %24 = vector.broadcast %22 : vector<64x1xf32> to vector<64x128xf32>
    %25 = vector.broadcast %23 : vector<1x128xf32> to vector<64x128xf32>
    %26 = arith.mulf %24, %25 : vector<64x128xf32>
    %27 = arith.addf %21, %26 : vector<64x128xf32>
    %cst = arith.constant 0.000000e+00 : f32
    %28 = vector.broadcast %cst : f32 to vector<64x128xf32>
    %29 = arith.maximumf %27, %28 : vector<64x128xf32>
    %30 = arith.truncf %29 : vector<64x128xf32> to vector<64x128xbf16>
    %c0_5 = arith.constant 0 : index
    %c0_6 = arith.constant 0 : index
    %31 = vector.load %arg4[%c0_5, %c0_6] : memref<128x128xbf16, #tpu.memory_space<vmem>>, vector<128x128xbf16>
    %cst_7 = arith.constant dense<0.000000e+00> : vector<64x128xf32>
    %32 = tpu.matmul %30, %31, %cst_7 {dimension_numbers = #tpu.dot_dimension_numbers<[1], [0], [0], [1], [0, 0, 1, 1], [], []>} : vector<64x128xbf16>, vector<128x128xbf16>, vector<64x128xf32> -> vector<64x128xf32>
    %c0_8 = arith.constant 0 : index
    %c0_9 = arith.constant 0 : index
    %33 = vector.load %arg5[%c0_8, %c0_9] : memref<1x128xf32, #tpu.memory_space<vmem>>, vector<1x128xf32>
    %34 = vector.broadcast %33 : vector<1x128xf32> to vector<64x128xf32>
    %35 = arith.addf %32, %34 : vector<64x128xf32>
    %36 = vector.shape_cast %35 : vector<64x128xf32> to vector<8x8x128xf32>
    %cst_10 = arith.constant dense<0xFF800000> : vector<8x128xf32>
    %37 = vector.multi_reduction <maximumf>, %36, %cst_10 [1] : vector<8x8x128xf32> to vector<8x128xf32>
    %38 = arith.truncf %35 : vector<64x128xf32> to vector<64x128xbf16>
    %c0_11 = arith.constant 0 : index
    %c0_12 = arith.constant 0 : index
    %39 = vector.load %arg6[%c0_11, %c0_12] : memref<128x128xbf16, #tpu.memory_space<vmem>>, vector<128x128xbf16>
    %cst_13 = arith.constant dense<0.000000e+00> : vector<64x128xf32>
    %40 = tpu.matmul %38, %39, %cst_13 {dimension_numbers = #tpu.dot_dimension_numbers<[1], [0], [0], [1], [0, 0, 1, 1], [], []>} : vector<64x128xbf16>, vector<128x128xbf16>, vector<64x128xf32> -> vector<64x128xf32>
    %41 = arith.truncf %37 : vector<8x128xf32> to vector<8x128xbf16>
    %c0_14 = arith.constant 0 : index
    %c0_15 = arith.constant 0 : index
    %42 = vector.load %arg7[%c0_14, %c0_15] : memref<128x128xbf16, #tpu.memory_space<vmem>>, vector<128x128xbf16>
    %cst_16 = arith.constant dense<0.000000e+00> : vector<8x128xf32>
    %43 = tpu.matmul %41, %42, %cst_16 {dimension_numbers = #tpu.dot_dimension_numbers<[1], [0], [0], [1], [0, 0, 1, 1], [], []>} : vector<8x128xbf16>, vector<128x128xbf16>, vector<8x128xf32> -> vector<8x128xf32>
    %44 = vector.shape_cast %40 : vector<64x128xf32> to vector<8x8x128xf32>
    %45 = vector.shape_cast %43 : vector<8x128xf32> to vector<8x1x128xf32>
    %46 = vector.broadcast %45 : vector<8x1x128xf32> to vector<8x8x128xf32>
    %47 = arith.addf %44, %46 : vector<8x8x128xf32>
    %c0_17 = arith.constant 0 : index
    %c0_18 = arith.constant 0 : index
    %48 = vector.load %arg8[%c0_17, %c0_18] : memref<1x128xf32, #tpu.memory_space<vmem>>, vector<1x128xf32>
    %49 = vector.shape_cast %48 : vector<1x128xf32> to vector<1x1x128xf32>
    %50 = vector.broadcast %49 : vector<1x1x128xf32> to vector<8x8x128xf32>
    %51 = arith.addf %47, %50 : vector<8x8x128xf32>
    %cst_19 = arith.constant 0.000000e+00 : f32
    %52 = vector.broadcast %cst_19 : f32 to vector<8x8x128xf32>
    %53 = arith.maximumf %51, %52 : vector<8x8x128xf32>
    %54 = vector.shape_cast %53 : vector<8x8x128xf32> to vector<64x128xf32>
    %55 = arith.truncf %54 : vector<64x128xf32> to vector<64x128xbf16>
    %c0_20 = arith.constant 0 : index
    %c0_21 = arith.constant 0 : index
    %56 = vector.load %arg9[%c0_20, %c0_21] : memref<128x128xbf16, #tpu.memory_space<vmem>>, vector<128x128xbf16>
    %cst_22 = arith.constant dense<0.000000e+00> : vector<64x128xf32>
    %57 = tpu.matmul %55, %56, %cst_22 {dimension_numbers = #tpu.dot_dimension_numbers<[1], [0], [0], [1], [0, 0, 1, 1], [], []>} : vector<64x128xbf16>, vector<128x128xbf16>, vector<64x128xf32> -> vector<64x128xf32>
    %c0_23 = arith.constant 0 : index
    %c0_24 = arith.constant 0 : index
    %58 = vector.load %arg10[%c0_23, %c0_24] : memref<1x128xf32, #tpu.memory_space<vmem>>, vector<1x128xf32>
    %59 = vector.broadcast %58 : vector<1x128xf32> to vector<64x128xf32>
    %60 = arith.addf %57, %59 : vector<64x128xf32>
    %61 = vector.shape_cast %60 : vector<64x128xf32> to vector<8x8x128xf32>
    %cst_25 = arith.constant dense<0xFF800000> : vector<8x128xf32>
    %62 = vector.multi_reduction <maximumf>, %61, %cst_25 [1] : vector<8x8x128xf32> to vector<8x128xf32>
    %c0_26 = arith.constant 0 : index
    %c0_27 = arith.constant 0 : index
    %63 = vector.load %arg11[%c0_26, %c0_27] : memref<8x128xf32, #tpu.memory_space<vmem>>, vector<8x128xf32>
    tpu.vector_store %arg11[%c0_26, %c0_27], %62 {strides = array<i32>} : memref<8x128xf32, #tpu.memory_space<vmem>>, vector<8x128xf32>,
    return
  }
  func.func @transform_0(%arg0: i32) -> (i32, i32) {
    %c0_i32 = arith.constant 0 : i32
    %c0_i32_0 = arith.constant 0 : i32
    return %arg0, %c0_i32 : i32, i32
  }
  func.func @transform_1(%arg0: i32) -> (i32, i32) {
    %c0_i32 = arith.constant 0 : i32
    %c0_i32_0 = arith.constant 0 : i32
    %c0_i32_1 = arith.constant 0 : i32
    return %c0_i32, %c0_i32_0 : i32, i32
  }
  func.func @transform_2(%arg0: i32) -> (i32, i32) {
    %c0_i32 = arith.constant 0 : i32
    %c0_i32_0 = arith.constant 0 : i32
    %c0_i32_1 = arith.constant 0 : i32
    return %c0_i32, %c0_i32_0 : i32, i32
  }
  func.func @transform_3(%arg0: i32) -> (i32, i32) {
    %c0_i32 = arith.constant 0 : i32
    %c0_i32_0 = arith.constant 0 : i32
    %c0_i32_1 = arith.constant 0 : i32
    return %c0_i32, %c0_i32_0 : i32, i32
  }
  func.func @transform_4(%arg0: i32) -> (i32, i32) {
    %c0_i32 = arith.constant 0 : i32
    %c0_i32_0 = arith.constant 0 : i32
    %c0_i32_1 = arith.constant 0 : i32
    return %c0_i32, %c0_i32_0 : i32, i32
  }
  func.func @transform_5(%arg0: i32) -> (i32, i32) {
    %c0_i32 = arith.constant 0 : i32
    %c0_i32_0 = arith.constant 0 : i32
    %c0_i32_1 = arith.constant 0 : i32
    return %c0_i32, %c0_i32_0 : i32, i32
  }
  func.func @transform_6(%arg0: i32) -> (i32, i32) {
    %c0_i32 = arith.constant 0 : i32
    %c0_i32_0 = arith.constant 0 : i32
    %c0_i32_1 = arith.constant 0 : i32
    return %c0_i32, %c0_i32_0 : i32, i32
  }
  func.func @transform_7(%arg0: i32) -> (i32, i32) {
    %c0_i32 = arith.constant 0 : i32
    %c0_i32_0 = arith.constant 0 : i32
    %c0_i32_1 = arith.constant 0 : i32
    return %c0_i32, %c0_i32_0 : i32, i32
  }
  func.func @transform_8(%arg0: i32) -> (i32, i32) {
    %c0_i32 = arith.constant 0 : i32
    %c0_i32_0 = arith.constant 0 : i32
    %c0_i32_1 = arith.constant 0 : i32
    return %c0_i32, %c0_i32_0 : i32, i32
  }
  func.func @transform_9(%arg0: i32) -> (i32, i32) {
    %c0_i32 = arith.constant 0 : i32
    %c0_i32_0 = arith.constant 0 : i32
    %c0_i32_1 = arith.constant 0 : i32
    return %c0_i32, %c0_i32_0 : i32, i32
  }
  func.func @transform_10(%arg0: i32) -> (i32, i32) {
    %c0_i32 = arith.constant 0 : i32
    %c0_i32_0 = arith.constant 0 : i32
    return %arg0, %c0_i32 : i32, i32
  }
}

</mosaic_0001>

<llo_original>
// kernel: group_encoder_forward.1
$region0: #{group_encoder_forward.1}
  #allocation0 [shape = 'u32[]', space=smem, size = 0x4, offset = 0x4, fixed_abs, tag = 'smem constant byte address 0x4 - core index']
  #allocation1 [shape = 'u32[144,128]{1,0:T(1,128)}', space=vmem, size = 0x12000, scoped, tag = 'internal scratch']
  %s0 = inlined_call_operand.vmem [shape: f32[64,4], index: 0, kind: input, shape index: {}]
  %s1 = inlined_call_operand.vmem [shape: f32[4,128], index: 1, kind: input, shape index: {}]
  %s2 = inlined_call_operand.vmem [shape: f32[1,128], index: 2, kind: input, shape index: {}]
  %s3 = inlined_call_operand.vmem [shape: bf16[128,128], index: 3, kind: input, shape index: {}]
  %s4 = inlined_call_operand.vmem [shape: f32[1,128], index: 4, kind: input, shape index: {}]
  %s5 = inlined_call_operand.vmem [shape: bf16[128,128], index: 5, kind: input, shape index: {}]
  %s6 = inlined_call_operand.vmem [shape: bf16[128,128], index: 6, kind: input, shape index: {}]
  %s7 = inlined_call_operand.vmem [shape: f32[1,128], index: 7, kind: input, shape index: {}]
  %s8 = inlined_call_operand.vmem [shape: bf16[128,128], index: 8, kind: input, shape index: {}]
  %s9 = inlined_call_operand.vmem [shape: f32[1,128], index: 9, kind: input, shape index: {}]
  %s10 = inlined_call_operand.hbm [shape: f32[8,128], index: 10, kind: output, shape index: {}]
  %s11 = sld [smem:[#allocation0]]
  $region50: #{group_encoder_forward.1} parent=0
    _
  %s13 = ssub.s32 1, %s11
  %s14 = scalar_select 0, %s13, %s11
  $region1: #{group_encoder_forward.1} parent=0
    #allocation2 [shape = 'u8[4096]{0}', space=vmem, size = 0x1000, scoped, tag = 'output window, operand 0, single buffered']
    #allocation3 [shape = 's32[1]{0}', space=sflag, size = 0x4, scoped, tag = 'scoped memory for group_encoder_forward.1']
    %15 = vsyncpa [#allocation3], 0
    // Predicated region
    $region2: #{group_encoder_forward.1} parent=1 // pred_check
      _
    $region3: #{group_encoder_forward.1} parent=1 // pred_check_branch
      %17 = sbr.rel (0) target = $region5
    $region4: #{group_encoder_forward.1} parent=1 // pred_region
      _
    $region5: #{group_encoder_forward.1} parent=1 // pred_fallthru
      _
    // Predicated region
    $region6: #{group_encoder_forward.1} parent=1 // pred_check
      _
    $region7: #{group_encoder_forward.1} parent=1 // pred_check_branch
      %19 = sbr.rel (0) target = $region9
    $region8: #{group_encoder_forward.1} parent=1 // pred_region
      _
    $region9: #{group_encoder_forward.1} parent=1 // pred_fallthru
      _
    // Predicated region
    $region10: #{group_encoder_forward.1} parent=1 // pred_check
      _
    $region11: #{group_encoder_forward.1} parent=1 // pred_check_branch
      %21 = sbr.rel (0) target = $region13
    $region12: #{group_encoder_forward.1} parent=1 // pred_region
      _
    $region13: #{group_encoder_forward.1} parent=1 // pred_fallthru
      _
    // Predicated region
    $region14: #{group_encoder_forward.1} parent=1 // pred_check
      _
    $region15: #{group_encoder_forward.1} parent=1 // pred_check_branch
      %23 = sbr.rel (0) target = $region17
    $region16: #{group_encoder_forward.1} parent=1 // pred_region
      _
    $region17: #{group_encoder_forward.1} parent=1 // pred_fallthru
      _
    // Predicated region
    $region18: #{group_encoder_forward.1} parent=1 // pred_check
      _
    $region19: #{group_encoder_forward.1} parent=1 // pred_check_branch
      %25 = sbr.rel (0) target = $region21
    $region20: #{group_encoder_forward.1} parent=1 // pred_region
      _
    $region21: #{group_encoder_forward.1} parent=1 // pred_fallthru
      _
    // Predicated region
    $region22: #{group_encoder_forward.1} parent=1 // pred_check
      _
    $region23: #{group_encoder_forward.1} parent=1 // pred_check_branch
      %27 = sbr.rel (0) target = $region25
    $region24: #{group_encoder_forward.1} parent=1 // pred_region
      _
    $region25: #{group_encoder_forward.1} parent=1 // pred_fallthru
      _
    // Predicated region
    $region26: #{group_encoder_forward.1} parent=1 // pred_check
      _
    $region27: #{group_encoder_forward.1} parent=1 // pred_check_branch
      %29 = sbr.rel (0) target = $region29
    $region28: #{group_encoder_forward.1} parent=1 // pred_region
      _
    $region29: #{group_encoder_forward.1} parent=1 // pred_fallthru
      _
    // Predicated region
    $region30: #{group_encoder_forward.1} parent=1 // pred_check
      _
    $region31: #{group_encoder_forward.1} parent=1 // pred_check_branch
      %31 = sbr.rel (0) target = $region33
    $region32: #{group_encoder_forward.1} parent=1 // pred_region
      _
    $region33: #{group_encoder_forward.1} parent=1 // pred_fallthru
      _
    // Predicated region
    $region34: #{group_encoder_forward.1} parent=1 // pred_check
      _
    $region35: #{group_encoder_forward.1} parent=1 // pred_check_branch
      %33 = sbr.rel (0) target = $region37
    $region36: #{group_encoder_forward.1} parent=1 // pred_region
      _
    $region37: #{group_encoder_forward.1} parent=1 // pred_fallthru
      _
    // Predicated region
    $region38: #{group_encoder_forward.1} parent=1 // pred_check
      _
    $region39: #{group_encoder_forward.1} parent=1 // pred_check_branch
      %35 = sbr.rel (0) target = $region41
    $region40: #{group_encoder_forward.1} parent=1 // pred_region
      _
    $region41: #{group_encoder_forward.1} parent=1 // pred_fallthru
      _
    %v37 = vld [vmem:[%s0] sm:$0xff]
    %v38 = vld [vmem:[%s0 + $0x8] sm:$0xff]
    %v39 = vld [vmem:[%s0 + $0x10] sm:$0xff]
    %v40 = vld [vmem:[%s0 + $0x18] sm:$0xff]
    %v41 = vld [vmem:[%s0 + $0x20] sm:$0xff]
    %v42 = vld [vmem:[%s0 + $0x28] sm:$0xff]
    %v43 = vld [vmem:[%s0 + $0x30] sm:$0xff]
    %v44 = vld [vmem:[%s0 + $0x38] sm:$0xff]
    %v45 = vld [vmem:[%s1] sm:$0xf]
    %47 = vset.pattern.permute.xlu0 0
    %48 = vperm.xlu0 %47, %v37
    %v49 = vpop.permute.xlu0 %48
    %52 = vset.pattern.permute.xlu0 0
    %53 = vperm.xlu0 %52, %v38
    %v54 = vpop.permute.xlu0 %53
    %57 = vset.pattern.permute.xlu0 0
    %58 = vperm.xlu0 %57, %v39
    %v59 = vpop.permute.xlu0 %58
    %62 = vset.pattern.permute.xlu0 0
    %63 = vperm.xlu0 %62, %v40
    %v64 = vpop.permute.xlu0 %63
    %67 = vset.pattern.permute.xlu0 0
    %68 = vperm.xlu0 %67, %v41
    %v69 = vpop.permute.xlu0 %68
    %72 = vset.pattern.permute.xlu0 0
    %73 = vperm.xlu0 %72, %v42
    %v74 = vpop.permute.xlu0 %73
    %77 = vset.pattern.permute.xlu0 0
    %78 = vperm.xlu0 %77, %v43
    %v79 = vpop.permute.xlu0 %78
    %82 = vset.pattern.permute.xlu0 0
    %83 = vperm.xlu0 %82, %v44
    %v84 = vpop.permute.xlu0 %83
    %v86 = vlaneseq
    %v87 = vshrl.u32 %v86, 7
    %v88 = vsub.s32 0, %v87
    %v89 = vrot.slane %v45, %v88
    %v90 = vmul.f32 %v49, %v89
    %v91 = vmul.f32 %v54, %v89
    %v92 = vmul.f32 %v59, %v89
    %v93 = vmul.f32 %v64, %v89
    %v94 = vmul.f32 %v69, %v89
    %v95 = vmul.f32 %v74, %v89
    %v96 = vmul.f32 %v79, %v89
    %v97 = vmul.f32 %v84, %v89
    %v98 = vld [vmem:[%s2] sm:$0x1]
    %v100 = vlaneseq
    %v101 = vshrl.u32 %v100, 7
    %v102 = vsub.s32 0, %v101
    %v103 = vrot.slane %v98, %v102
    %v105 = vadd.f32 %v90, %v103
    %v106 = vadd.f32 %v91, %v103
    %v107 = vadd.f32 %v92, %v103
    %v108 = vadd.f32 %v93, %v103
    %v109 = vadd.f32 %v94, %v103
    %v110 = vadd.f32 %v95, %v103
    %v111 = vadd.f32 %v96, %v103
    %v112 = vadd.f32 %v97, %v103
    %113 = vset.pattern.permute.xlu0 1
    %114 = vperm.xlu0 %113, %v37
    %v115 = vpop.permute.xlu0 %114
    %117 = vset.pattern.permute.xlu0 1
    %118 = vperm.xlu0 %117, %v38
    %v119 = vpop.permute.xlu0 %118
    %121 = vset.pattern.permute.xlu0 1
    %122 = vperm.xlu0 %121, %v39
    %v123 = vpop.permute.xlu0 %122
    %125 = vset.pattern.permute.xlu0 1
    %126 = vperm.xlu0 %125, %v40
    %v127 = vpop.permute.xlu0 %126
    %129 = vset.pattern.permute.xlu0 1
    %130 = vperm.xlu0 %129, %v41
    %v131 = vpop.permute.xlu0 %130
    %133 = vset.pattern.permute.xlu0 1
    %134 = vperm.xlu0 %133, %v42
    %v135 = vpop.permute.xlu0 %134
    %137 = vset.pattern.permute.xlu0 1
    %138 = vperm.xlu0 %137, %v43
    %v139 = vpop.permute.xlu0 %138
    %141 = vset.pattern.permute.xlu0 1
    %142 = vperm.xlu0 %141, %v44
    %v143 = vpop.permute.xlu0 %142
    %v145 = vlaneseq
    %v146 = vshrl.u32 %v145, 7
    %v147 = vsub.s32 1, %v146
    %v148 = vrot.slane %v45, %v147
    %v149 = vmul.f32 %v115, %v148
    %v150 = vmul.f32 %v119, %v148
    %v151 = vmul.f32 %v123, %v148
    %v152 = vmul.f32 %v127, %v148
    %v153 = vmul.f32 %v131, %v148
    %v154 = vmul.f32 %v135, %v148
    %v155 = vmul.f32 %v139, %v148
    %v156 = vmul.f32 %v143, %v148
    %v157 = vadd.f32 %v105, %v149
    %v158 = vadd.f32 %v106, %v150
    %v159 = vadd.f32 %v107, %v151
    %v160 = vadd.f32 %v108, %v152
    %v161 = vadd.f32 %v109, %v153
    %v162 = vadd.f32 %v110, %v154
    %v163 = vadd.f32 %v111, %v155
    %v164 = vadd.f32 %v112, %v156
    %165 = vset.pattern.permute.xlu0 2
    %166 = vperm.xlu0 %165, %v37
    %v167 = vpop.permute.xlu0 %166
    %169 = vset.pattern.permute.xlu0 2
    %170 = vperm.xlu0 %169, %v38
    %v171 = vpop.permute.xlu0 %170
    %173 = vset.pattern.permute.xlu0 2
    %174 = vperm.xlu0 %173, %v39
    %v175 = vpop.permute.xlu0 %174
    %177 = vset.pattern.permute.xlu0 2
    %178 = vperm.xlu0 %177, %v40
    %v179 = vpop.permute.xlu0 %178
    %181 = vset.pattern.permute.xlu0 2
    %182 = vperm.xlu0 %181, %v41
    %v183 = vpop.permute.xlu0 %182
    %185 = vset.pattern.permute.xlu0 2
    %186 = vperm.xlu0 %185, %v42
    %v187 = vpop.permute.xlu0 %186
    %189 = vset.pattern.permute.xlu0 2
    %190 = vperm.xlu0 %189, %v43
    %v191 = vpop.permute.xlu0 %190
    %193 = vset.pattern.permute.xlu0 2
    %194 = vperm.xlu0 %193, %v44
    %v195 = vpop.permute.xlu0 %194
    %v197 = vlaneseq
    %v198 = vshrl.u32 %v197, 7
    %v199 = vsub.s32 2, %v198
    %v200 = vrot.slane %v45, %v199
    %v201 = vmul.f32 %v167, %v200
    %v202 = vmul.f32 %v171, %v200
    %v203 = vmul.f32 %v175, %v200
    %v204 = vmul.f32 %v179, %v200
    %v205 = vmul.f32 %v183, %v200
    %v206 = vmul.f32 %v187, %v200
    %v207 = vmul.f32 %v191, %v200
    %v208 = vmul.f32 %v195, %v200
    %v209 = vadd.f32 %v157, %v201
    %v210 = vadd.f32 %v158, %v202
    %v211 = vadd.f32 %v159, %v203
    %v212 = vadd.f32 %v160, %v204
    %v213 = vadd.f32 %v161, %v205
    %v214 = vadd.f32 %v162, %v206
    %v215 = vadd.f32 %v163, %v207
    %v216 = vadd.f32 %v164, %v208
    %217 = vset.pattern.permute.xlu0 3
    %218 = vperm.xlu0 %217, %v37
    %v219 = vpop.permute.xlu0 %218
    %221 = vset.pattern.permute.xlu0 3
    %222 = vperm.xlu0 %221, %v38
    %v223 = vpop.permute.xlu0 %222
    %225 = vset.pattern.permute.xlu0 3
    %226 = vperm.xlu0 %225, %v39
    %v227 = vpop.permute.xlu0 %226
    %229 = vset.pattern.permute.xlu0 3
    %230 = vperm.xlu0 %229, %v40
    %v231 = vpop.permute.xlu0 %230
    %233 = vset.pattern.permute.xlu0 3
    %234 = vperm.xlu0 %233, %v41
    %v235 = vpop.permute.xlu0 %234
    %237 = vset.pattern.permute.xlu0 3
    %238 = vperm.xlu0 %237, %v42
    %v239 = vpop.permute.xlu0 %238
    %241 = vset.pattern.permute.xlu0 3
    %242 = vperm.xlu0 %241, %v43
    %v243 = vpop.permute.xlu0 %242
    %245 = vset.pattern.permute.xlu0 3
    %246 = vperm.xlu0 %245, %v44
    %v247 = vpop.permute.xlu0 %246
    %v249 = vlaneseq
    %v250 = vshrl.u32 %v249, 7
    %v251 = vsub.s32 3, %v250
    %v252 = vrot.slane %v45, %v251
    %v253 = vmul.f32 %v219, %v252
    %v254 = vmul.f32 %v223, %v252
    %v255 = vmul.f32 %v227, %v252
    %v256 = vmul.f32 %v231, %v252
    %v257 = vmul.f32 %v235, %v252
    %v258 = vmul.f32 %v239, %v252
    %v259 = vmul.f32 %v243, %v252
    %v260 = vmul.f32 %v247, %v252
    %v261 = vadd.f32 %v209, %v253
    %v262 = vadd.f32 %v210, %v254
    %v263 = vadd.f32 %v211, %v255
    %v264 = vadd.f32 %v212, %v256
    %v265 = vadd.f32 %v213, %v257
    %v266 = vadd.f32 %v214, %v258
    %v267 = vadd.f32 %v215, %v259
    %v268 = vadd.f32 %v216, %v260
    %v269 = vmax.f32 %v261, 0.0
    %v270 = vmax.f32 %v262, 0.0
    %v271 = vmax.f32 %v263, 0.0
    %v272 = vmax.f32 %v264, 0.0
    %v273 = vmax.f32 %v265, 0.0
    %v274 = vmax.f32 %v266, 0.0
    %v275 = vmax.f32 %v267, 0.0
    %v276 = vmax.f32 %v268, 0.0
    %v277 = vpack.c.bf16 %v270, %v269
    %v278 = vpack.c.bf16 %v272, %v271
    %v279 = vpack.c.bf16 %v274, %v273
    %v280 = vpack.c.bf16 %v276, %v275
    %v281 = vld [vmem:[%s3] sm:$0xf]
    %v282 = vld [vmem:[%s3 + $0x4] sm:$0xf]
    %v283 = vld [vmem:[%s3 + $0x8] sm:$0xf]
    %v284 = vld [vmem:[%s3 + $0xc] sm:$0xf]
    %v285 = vld [vmem:[%s3 + $0x10] sm:$0xf]
    %v286 = vld [vmem:[%s3 + $0x14] sm:$0xf]
    %v287 = vld [vmem:[%s3 + $0x18] sm:$0xf]
    %v288 = vld [vmem:[%s3 + $0x1c] sm:$0xf]
    %v289 = vld [vmem:[%s3 + $0x20] sm:$0xf]
    %v290 = vld [vmem:[%s3 + $0x24] sm:$0xf]
    %v291 = vld [vmem:[%s3 + $0x28] sm:$0xf]
    %v292 = vld [vmem:[%s3 + $0x2c] sm:$0xf]
    %v293 = vld [vmem:[%s3 + $0x30] sm:$0xf]
    %v294 = vld [vmem:[%s3 + $0x34] sm:$0xf]
    %v295 = vld [vmem:[%s3 + $0x38] sm:$0xf]
    %v296 = vld [vmem:[%s3 + $0x3c] sm:$0xf]
    %v297 = vld [vmem:[%s4] sm:$0x1]
    %v299 = vlaneseq
    %v300 = vshrl.u32 %v299, 7
    %v301 = vsub.s32 0, %v300
    %v302 = vrot.slane %v297, %v301
    %v320 = vunpack.c.l.b16 %v281
    %v321 = vunpack.c.l.b16 %v282
    %v322 = vunpack.c.l.b16 %v283
    %v323 = vunpack.c.l.b16 %v284
    %v324 = vunpack.c.l.b16 %v285
    %v325 = vunpack.c.l.b16 %v286
    %v326 = vunpack.c.l.b16 %v287
    %v327 = vunpack.c.l.b16 %v288
    %v328 = vunpack.c.l.b16 %v289
    %v329 = vunpack.c.l.b16 %v290
    %v330 = vunpack.c.l.b16 %v291
    %v331 = vunpack.c.l.b16 %v292
    %v332 = vunpack.c.l.b16 %v293
    %v333 = vunpack.c.l.b16 %v294
    %v334 = vunpack.c.l.b16 %v295
    %v335 = vunpack.c.l.b16 %v296
    %v336 = vpack.c.b16 %v321, %v320
    %v337 = vpack.c.b16 %v323, %v322
    %v338 = vpack.c.b16 %v325, %v324
    %v339 = vpack.c.b16 %v327, %v326
    %v340 = vpack.c.b16 %v329, %v328
    %v341 = vpack.c.b16 %v331, %v330
    %v342 = vpack.c.b16 %v333, %v332
    %v343 = vpack.c.b16 %v335, %v334
    %352 = vmatprep.subr.bf16.mxu0 0
    %353 = vmatpush1.bf16.msra.mxu0 %v343
    %354 = vmatprep.subr.bf16.mxu0 0
    %355 = vmatpush1.bf16.msra.mxu0 %v342
    %356 = vmatprep.subr.bf16.mxu0 0
    %357 = vmatpush1.bf16.msra.mxu0 %v341
    %358 = vmatprep.subr.bf16.mxu0 0
    %359 = vmatpush1.bf16.msra.mxu0 %v340
    %360 = vmatprep.subr.bf16.mxu0 0
    %361 = vmatpush1.bf16.msra.mxu0 %v339
    %362 = vmatprep.subr.bf16.mxu0 0
    %363 = vmatpush1.bf16.msra.mxu0 %v338
    %364 = vmatprep.subr.bf16.mxu0 0
    %365 = vmatpush1.bf16.msra.mxu0 %v337
    %366 = vmatprep.subr.bf16.mxu0 0
    %367 = vmatpush1.bf16.msra.mxu0 %v336
    %368 = vmatprep.subr.bf16.mxu0 0
    %369 = vmatpush2.bf16.msra.mxu0 0
    %370 = vmatprep.subr.bf16.mxu0 0
    %371 = vmatpush2.bf16.msra.mxu0 0
    %372 = vmatprep.subr.bf16.mxu0 0
    %373 = vmatpush2.bf16.msra.mxu0 0
    %374 = vmatprep.subr.bf16.mxu0 0
    %375 = vmatpush2.bf16.msra.mxu0 0
    %376 = vmatprep.subr.bf16.mxu0 0
    %377 = vmatpush2.bf16.msra.mxu0 0
    %378 = vmatprep.subr.bf16.mxu0 0
    %379 = vmatpush2.bf16.msra.mxu0 0
    %380 = vmatprep.subr.bf16.mxu0 0
    %381 = vmatpush2.bf16.msra.mxu0 0
    %382 = vmatprep.subr.bf16.mxu0 0
    %383 = vmatpush2.bf16.msra.mxu0 0
    %384 = vmatprep.mubr.bf16.mxu0 0
    %385 = vmatmul.mubr.bf16.gmra.mxu0 %v277
    %v386 = vpop.f32.mrf.mxu0
    %v387 = vadd.f32 %v302, %v386
    %v388 = vpop.f32.mrf.mxu0
    %v389 = vpop.f32.mrf.mxu0
    %v390 = vadd.f32 %v302, %v389
    %v391 = vpop.f32.mrf.mxu0
    %392 = vmatprep.mubr.bf16.mxu0 0
    %393 = vmatmul.mubr.bf16.gmra.mxu0 %v278
    %v394 = vpop.f32.mrf.mxu0
    %v395 = vadd.f32 %v302, %v394
    %v396 = vpop.f32.mrf.mxu0
    %v397 = vpop.f32.mrf.mxu0
    %v398 = vadd.f32 %v302, %v397
    %v399 = vpop.f32.mrf.mxu0
    %400 = vmatprep.mubr.bf16.mxu0 0
    %401 = vmatmul.mubr.bf16.gmra.mxu0 %v279
    %v402 = vpop.f32.mrf.mxu0
    %v403 = vadd.f32 %v302, %v402
    %v404 = vpop.f32.mrf.mxu0
    %v405 = vpop.f32.mrf.mxu0
    %v406 = vadd.f32 %v302, %v405
    %v407 = vpop.f32.mrf.mxu0
    %408 = vmatprep.mubr.bf16.mxu0 0
    %409 = vmatmul.mubr.bf16.gmra.mxu0 %v280
    %v410 = vpop.f32.mrf.mxu0
    %v411 = vadd.f32 %v302, %v410
    %v412 = vpop.f32.mrf.mxu0
    %v413 = vpop.f32.mrf.mxu0
    %v414 = vadd.f32 %v302, %v413
    %v415 = vpop.f32.mrf.mxu0
    %416 = vdwg.mxu0
    %v417 = vrot.slane %v387, 4
    %v418 = vmax.f32 %v387, %v417
    %v419 = vrot.slane %v418, 2
    %v420 = vmax.f32 %v418, %v419
    %v421 = vrot.slane %v420, 1
    %v422 = vmax.f32 %v420, %v421
    %v423 = vrot.slane %v390, 4
    %v424 = vmax.f32 %v390, %v423
    %v425 = vrot.slane %v424, 2
    %v426 = vmax.f32 %v424, %v425
    %v427 = vrot.slane %v426, 1
    %v428 = vmax.f32 %v426, %v427
    %v429 = vrot.slane %v395, 4
    %v430 = vmax.f32 %v395, %v429
    %v431 = vrot.slane %v430, 2
    %v432 = vmax.f32 %v430, %v431
    %v433 = vrot.slane %v432, 1
    %v434 = vmax.f32 %v432, %v433
    %v435 = vrot.slane %v398, 4
    %v436 = vmax.f32 %v398, %v435
    %v437 = vrot.slane %v436, 2
    %v438 = vmax.f32 %v436, %v437
    %v439 = vrot.slane %v438, 1
    %v440 = vmax.f32 %v438, %v439
    %v441 = vrot.slane %v403, 4
    %v442 = vmax.f32 %v403, %v441
    %v443 = vrot.slane %v442, 2
    %v444 = vmax.f32 %v442, %v443
    %v445 = vrot.slane %v444, 1
    %v446 = vmax.f32 %v444, %v445
    %v447 = vrot.slane %v406, 4
    %v448 = vmax.f32 %v406, %v447
    %v449 = vrot.slane %v448, 2
    %v450 = vmax.f32 %v448, %v449
    %v451 = vrot.slane %v450, 1
    %v452 = vmax.f32 %v450, %v451
    %v453 = vrot.slane %v411, 4
    %v454 = vmax.f32 %v411, %v453
    %v455 = vrot.slane %v454, 2
    %v456 = vmax.f32 %v454, %v455
    %v457 = vrot.slane %v456, 1
    %v458 = vmax.f32 %v456, %v457
    %v459 = vrot.slane %v414, 4
    %v460 = vmax.f32 %v414, %v459
    %v461 = vrot.slane %v460, 2
    %v462 = vmax.f32 %v460, %v461
    %v463 = vrot.slane %v462, 1
    %v464 = vmax.f32 %v462, %v463
    %v465 = vpack.c.bf16 %v390, %v387
    %v466 = vpack.c.bf16 %v398, %v395
    %v467 = vpack.c.bf16 %v406, %v403
    %v468 = vpack.c.bf16 %v414, %v411
    %v469 = vld [vmem:[%s5] sm:$0xf]
    %v470 = vld [vmem:[%s5 + $0x4] sm:$0xf]
    %v471 = vld [vmem:[%s5 + $0x8] sm:$0xf]
    %v472 = vld [vmem:[%s5 + $0xc] sm:$0xf]
    %v473 = vld [vmem:[%s5 + $0x10] sm:$0xf]
    %v474 = vld [vmem:[%s5 + $0x14] sm:$0xf]
    %v475 = vld [vmem:[%s5 + $0x18] sm:$0xf]
    %v476 = vld [vmem:[%s5 + $0x1c] sm:$0xf]
    %v477 = vld [vmem:[%s5 + $0x20] sm:$0xf]
    %v478 = vld [vmem:[%s5 + $0x24] sm:$0xf]
    %v479 = vld [vmem:[%s5 + $0x28] sm:$0xf]
    %v480 = vld [vmem:[%s5 + $0x2c] sm:$0xf]
    %v481 = vld [vmem:[%s5 + $0x30] sm:$0xf]
    %v482 = vld [vmem:[%s5 + $0x34] sm:$0xf]
    %v483 = vld [vmem:[%s5 + $0x38] sm:$0xf]
    %v484 = vld [vmem:[%s5 + $0x3c] sm:$0xf]
    %v501 = vunpack.c.l.b16 %v469
    %v502 = vunpack.c.l.b16 %v470
    %v503 = vunpack.c.l.b16 %v471
    %v504 = vunpack.c.l.b16 %v472
    %v505 = vunpack.c.l.b16 %v473
    %v506 = vunpack.c.l.b16 %v474
    %v507 = vunpack.c.l.b16 %v475
    %v508 = vunpack.c.l.b16 %v476
    %v509 = vunpack.c.l.b16 %v477
    %v510 = vunpack.c.l.b16 %v478
    %v511 = vunpack.c.l.b16 %v479
    %v512 = vunpack.c.l.b16 %v480
    %v513 = vunpack.c.l.b16 %v481
    %v514 = vunpack.c.l.b16 %v482
    %v515 = vunpack.c.l.b16 %v483
    %v516 = vunpack.c.l.b16 %v484
    %v517 = vpack.c.b16 %v502, %v501
    %v518 = vpack.c.b16 %v504, %v503
    %v519 = vpack.c.b16 %v506, %v505
    %v520 = vpack.c.b16 %v508, %v507
    %v521 = vpack.c.b16 %v510, %v509
    %v522 = vpack.c.b16 %v512, %v511
    %v523 = vpack.c.b16 %v514, %v513
    %v524 = vpack.c.b16 %v516, %v515
    %533 = vmatprep.subr.bf16.mxu0 0
    %534 = vmatpush1.bf16.msra.mxu0 %v524
    %535 = vmatprep.subr.bf16.mxu0 0
    %536 = vmatpush1.bf16.msra.mxu0 %v523
    %537 = vmatprep.subr.bf16.mxu0 0
    %538 = vmatpush1.bf16.msra.mxu0 %v522
    %539 = vmatprep.subr.bf16.mxu0 0
    %540 = vmatpush1.bf16.msra.mxu0 %v521
    %541 = vmatprep.subr.bf16.mxu0 0
    %542 = vmatpush1.bf16.msra.mxu0 %v520
    %543 = vmatprep.subr.bf16.mxu0 0
    %544 = vmatpush1.bf16.msra.mxu0 %v519
    %545 = vmatprep.subr.bf16.mxu0 0
    %546 = vmatpush1.bf16.msra.mxu0 %v518
    %547 = vmatprep.subr.bf16.mxu0 0
    %548 = vmatpush1.bf16.msra.mxu0 %v517
    %549 = vmatprep.subr.bf16.mxu0 0
    %550 = vmatpush2.bf16.msra.mxu0 0
    %551 = vmatprep.subr.bf16.mxu0 0
    %552 = vmatpush2.bf16.msra.mxu0 0
    %553 = vmatprep.subr.bf16.mxu0 0
    %554 = vmatpush2.bf16.msra.mxu0 0
    %555 = vmatprep.subr.bf16.mxu0 0
    %556 = vmatpush2.bf16.msra.mxu0 0
    %557 = vmatprep.subr.bf16.mxu0 0
    %558 = vmatpush2.bf16.msra.mxu0 0
    %559 = vmatprep.subr.bf16.mxu0 0
    %560 = vmatpush2.bf16.msra.mxu0 0
    %561 = vmatprep.subr.bf16.mxu0 0
    %562 = vmatpush2.bf16.msra.mxu0 0
    %563 = vmatprep.subr.bf16.mxu0 0
    %564 = vmatpush2.bf16.msra.mxu0 0
    %565 = vmatprep.mubr.bf16.mxu0 0
    %566 = vmatmul.mubr.bf16.gmra.mxu0 %v465
    %v567 = vpop.f32.mrf.mxu0
    %v568 = vadd.f32 0.0, %v567
    %v569 = vpop.f32.mrf.mxu0
    %v570 = vpop.f32.mrf.mxu0
    %v571 = vadd.f32 0.0, %v570
    %v572 = vpop.f32.mrf.mxu0
    %573 = vmatprep.mubr.bf16.mxu0 0
    %574 = vmatmul.mubr.bf16.gmra.mxu0 %v466
    %v575 = vpop.f32.mrf.mxu0
    %v576 = vadd.f32 0.0, %v575
    %v577 = vpop.f32.mrf.mxu0
    %v578 = vpop.f32.mrf.mxu0
    %v579 = vadd.f32 0.0, %v578
    %v580 = vpop.f32.mrf.mxu0
    %581 = vmatprep.mubr.bf16.mxu0 0
    %582 = vmatmul.mubr.bf16.gmra.mxu0 %v467
    %v583 = vpop.f32.mrf.mxu0
    %v584 = vadd.f32 0.0, %v583
    %v585 = vpop.f32.mrf.mxu0
    %v586 = vpop.f32.mrf.mxu0
    %v587 = vadd.f32 0.0, %v586
    %v588 = vpop.f32.mrf.mxu0
    %589 = vmatprep.mubr.bf16.mxu0 0
    %590 = vmatmul.mubr.bf16.gmra.mxu0 %v468
    %v591 = vpop.f32.mrf.mxu0
    %v592 = vadd.f32 0.0, %v591
    %v593 = vpop.f32.mrf.mxu0
    %v594 = vpop.f32.mrf.mxu0
    %v595 = vadd.f32 0.0, %v594
    %v596 = vpop.f32.mrf.mxu0
    %597 = vdwg.mxu0
    %v598 = vpack.c.bf16 %v422, %v422
    %v599 = vpack.c.bf16 %v428, %v428
    %v600 = vpack.c.bf16 %v434, %v434
    %v601 = vpack.c.bf16 %v440, %v440
    %v602 = vpack.c.bf16 %v446, %v446
    %v603 = vpack.c.bf16 %v452, %v452
    %v604 = vpack.c.bf16 %v458, %v458
    %v605 = vpack.c.bf16 %v464, %v464
    %v606 = vld [vmem:[%s6] sm:$0xf]
    %v607 = vld [vmem:[%s6 + $0x4] sm:$0xf]
    %v608 = vld [vmem:[%s6 + $0x8] sm:$0xf]
    %v609 = vld [vmem:[%s6 + $0xc] sm:$0xf]
    %v610 = vld [vmem:[%s6 + $0x10] sm:$0xf]
    %v611 = vld [vmem:[%s6 + $0x14] sm:$0xf]
    %v612 = vld [vmem:[%s6 + $0x18] sm:$0xf]
    %v613 = vld [vmem:[%s6 + $0x1c] sm:$0xf]
    %v614 = vld [vmem:[%s6 + $0x20] sm:$0xf]
    %v615 = vld [vmem:[%s6 + $0x24] sm:$0xf]
    %v616 = vld [vmem:[%s6 + $0x28] sm:$0xf]
    %v617 = vld [vmem:[%s6 + $0x2c] sm:$0xf]
    %v618 = vld [vmem:[%s6 + $0x30] sm:$0xf]
    %v619 = vld [vmem:[%s6 + $0x34] sm:$0xf]
    %v620 = vld [vmem:[%s6 + $0x38] sm:$0xf]
    %v621 = vld [vmem:[%s6 + $0x3c] sm:$0xf]
    %v630 = vunpack.c.l.b16 %v598
    %v631 = vunpack.c.l.b16 %v599
    %v632 = vunpack.c.l.b16 %v600
    %v633 = vunpack.c.l.b16 %v601
    %v634 = vunpack.c.l.b16 %v602
    %v635 = vunpack.c.l.b16 %v603
    %v636 = vunpack.c.l.b16 %v604
    %v637 = vunpack.c.l.b16 %v605
    %vm638 = vcmask 1041409
    %v639 = vsel %vm638, %v631, %v630
    %vm640 = vcmask 1042434
    %v641 = vsel %vm640, %v632, %v639
    %vm642 = vcmask 1043459
    %v643 = vsel %vm642, %v633, %v641
    %vm644 = vcmask 1044484
    %v645 = vsel %vm644, %v634, %v643
    %vm646 = vcmask 1045509
    %v647 = vsel %vm646, %v635, %v645
    %vm648 = vcmask 1046534
    %v649 = vsel %vm648, %v636, %v647
    %vm650 = vcmask 1047559
    %v651 = vsel %vm650, %v637, %v649
    %v652 = vpack.c.b16 %v651, %v651
    %v670 = vunpack.c.l.b16 %v606
    %v671 = vunpack.c.l.b16 %v607
    %v672 = vunpack.c.l.b16 %v608
    %v673 = vunpack.c.l.b16 %v609
    %v674 = vunpack.c.l.b16 %v610
    %v675 = vunpack.c.l.b16 %v611
    %v676 = vunpack.c.l.b16 %v612
    %v677 = vunpack.c.l.b16 %v613
    %v678 = vunpack.c.l.b16 %v614
    %v679 = vunpack.c.l.b16 %v615
    %v680 = vunpack.c.l.b16 %v616
    %v681 = vunpack.c.l.b16 %v617
    %v682 = vunpack.c.l.b16 %v618
    %v683 = vunpack.c.l.b16 %v619
    %v684 = vunpack.c.l.b16 %v620
    %v685 = vunpack.c.l.b16 %v621
    %v686 = vpack.c.b16 %v671, %v670
    %v687 = vpack.c.b16 %v673, %v672
    %v688 = vpack.c.b16 %v675, %v674
    %v689 = vpack.c.b16 %v677, %v676
    %v690 = vpack.c.b16 %v679, %v678
    %v691 = vpack.c.b16 %v681, %v680
    %v692 = vpack.c.b16 %v683, %v682
    %v693 = vpack.c.b16 %v685, %v684
    %702 = vmatprep.subr.bf16.mxu0 0
    %703 = vmatpush1.bf16.msra.mxu0 %v693
    %704 = vmatprep.subr.bf16.mxu0 0
    %705 = vmatpush1.bf16.msra.mxu0 %v692
    %706 = vmatprep.subr.bf16.mxu0 0
    %707 = vmatpush1.bf16.msra.mxu0 %v691
    %708 = vmatprep.subr.bf16.mxu0 0
    %709 = vmatpush1.bf16.msra.mxu0 %v690
    %710 = vmatprep.subr.bf16.mxu0 0
    %711 = vmatpush1.bf16.msra.mxu0 %v689
    %712 = vmatprep.subr.bf16.mxu0 0
    %713 = vmatpush1.bf16.msra.mxu0 %v688
    %714 = vmatprep.subr.bf16.mxu0 0
    %715 = vmatpush1.bf16.msra.mxu0 %v687
    %716 = vmatprep.subr.bf16.mxu0 0
    %717 = vmatpush1.bf16.msra.mxu0 %v686
    %718 = vmatprep.subr.bf16.mxu0 0
    %719 = vmatpush2.bf16.msra.mxu0 0
    %720 = vmatprep.subr.bf16.mxu0 0
    %721 = vmatpush2.bf16.msra.mxu0 0
    %722 = vmatprep.subr.bf16.mxu0 0
    %723 = vmatpush2.bf16.msra.mxu0 0
    %724 = vmatprep.subr.bf16.mxu0 0
    %725 = vmatpush2.bf16.msra.mxu0 0
    %726 = vmatprep.subr.bf16.mxu0 0
    %727 = vmatpush2.bf16.msra.mxu0 0
    %728 = vmatprep.subr.bf16.mxu0 0
    %729 = vmatpush2.bf16.msra.mxu0 0
    %730 = vmatprep.subr.bf16.mxu0 0
    %731 = vmatpush2.bf16.msra.mxu0 0
    %732 = vmatprep.subr.bf16.mxu0 0
    %733 = vmatpush2.bf16.msra.mxu0 0
    %734 = vmatprep.mubr.bf16.mxu0 0
    %735 = vmatmul.mubr.bf16.gmra.mxu0 %v652
    %v736 = vpop.f32.mrf.mxu0
    %v737 = vadd.f32 0.0, %v736
    %v738 = vpop.f32.mrf.mxu0
    %v739 = vpop.f32.mrf.mxu0
    %v740 = vpop.f32.mrf.mxu0
    %741 = vdwg.mxu0
    %v743 = vcombine.high %v737, %v737
    %v745 = vunpack.c.l.s4 1966171168
    %v746 = vunpack.c.0.s8 %v745
    %v747 = vlaneseq
    %v748 = vshrl.u32 %v747, 7
    %v749 = vsub.s32 %v746, %v748
    %v750 = vrot.slane %v737, %v749
    %v752 = vunpack.c.l.s4 1966171168
    %v753 = vunpack.c.0.s8 %v752
    %v754 = vlaneseq
    %v755 = vshrl.u32 %v754, 7
    %v756 = vsub.s32 %v753, %v755
    %v757 = vrot.slane %v743, %v756
    %v758 = vcombine.high %v750, %v750
    %v759 = vcombine.high %v757, %v757
    %v761 = vunpack.c.l.s4 1966171168
    %v762 = vunpack.c.0.s8 %v761
    %v763 = vlaneseq
    %v764 = vshrl.u32 %v763, 7
    %v765 = vsub.s32 %v762, %v764
    %v766 = vrot.slane %v750, %v765
    %v768 = vunpack.c.l.s4 1966171168
    %v769 = vunpack.c.0.s8 %v768
    %v770 = vlaneseq
    %v771 = vshrl.u32 %v770, 7
    %v772 = vsub.s32 %v769, %v771
    %v773 = vrot.slane %v757, %v772
    %v775 = vunpack.c.l.s4 1966171168
    %v776 = vunpack.c.0.s8 %v775
    %v777 = vlaneseq
    %v778 = vshrl.u32 %v777, 7
    %v779 = vsub.s32 %v776, %v778
    %v780 = vrot.slane %v758, %v779
    %v782 = vunpack.c.l.s4 1966171168
    %v783 = vunpack.c.0.s8 %v782
    %v784 = vlaneseq
    %v785 = vshrl.u32 %v784, 7
    %v786 = vsub.s32 %v783, %v785
    %v787 = vrot.slane %v759, %v786
    %v788 = vcombine.high %v766, %v766
    %v789 = vcombine.high %v773, %v773
    %v790 = vcombine.high %v780, %v780
    %v791 = vcombine.high %v787, %v787
    %v792 = vlaneseq
    %v793 = vshrl.u32 %v792, 7
    %v794 = vsub.s32 0, %v793
    %v795 = vrot.slane %v766, %v794
    %v796 = vlaneseq
    %v797 = vshrl.u32 %v796, 7
    %v798 = vsub.s32 0, %v797
    %v799 = vrot.slane %v780, %v798
    %v800 = vlaneseq
    %v801 = vshrl.u32 %v800, 7
    %v802 = vsub.s32 0, %v801
    %v803 = vrot.slane %v788, %v802
    %v804 = vlaneseq
    %v805 = vshrl.u32 %v804, 7
    %v806 = vsub.s32 0, %v805
    %v807 = vrot.slane %v790, %v806
    %v808 = vlaneseq
    %v809 = vshrl.u32 %v808, 7
    %v810 = vsub.s32 0, %v809
    %v811 = vrot.slane %v773, %v810
    %v812 = vlaneseq
    %v813 = vshrl.u32 %v812, 7
    %v814 = vsub.s32 0, %v813
    %v815 = vrot.slane %v787, %v814
    %v816 = vlaneseq
    %v817 = vshrl.u32 %v816, 7
    %v818 = vsub.s32 0, %v817
    %v819 = vrot.slane %v789, %v818
    %v820 = vlaneseq
    %v821 = vshrl.u32 %v820, 7
    %v822 = vsub.s32 0, %v821
    %v823 = vrot.slane %v791, %v822
    %v832 = vadd.f32 %v568, %v795
    %v833 = vadd.f32 %v571, %v799
    %v834 = vadd.f32 %v576, %v803
    %v835 = vadd.f32 %v579, %v807
    %v836 = vadd.f32 %v584, %v811
    %v837 = vadd.f32 %v587, %v815
    %v838 = vadd.f32 %v592, %v819
    %v839 = vadd.f32 %v595, %v823
    %v840 = vld [vmem:[%s7] sm:$0x1]
    %v842 = vlaneseq
    %v843 = vshrl.u32 %v842, 7
    %v844 = vsub.s32 0, %v843
    %v845 = vrot.slane %v840, %v844
    %v847 = vadd.f32 %v832, %v845
    %v848 = vadd.f32 %v833, %v845
    %v849 = vadd.f32 %v834, %v845
    %v850 = vadd.f32 %v835, %v845
    %v851 = vadd.f32 %v836, %v845
    %v852 = vadd.f32 %v837, %v845
    %v853 = vadd.f32 %v838, %v845
    %v854 = vadd.f32 %v839, %v845
    %v855 = vmax.f32 %v847, 0.0
    %v856 = vmax.f32 %v848, 0.0
    %v857 = vmax.f32 %v849, 0.0
    %v858 = vmax.f32 %v850, 0.0
    %v859 = vmax.f32 %v851, 0.0
    %v860 = vmax.f32 %v852, 0.0
    %v861 = vmax.f32 %v853, 0.0
    %v862 = vmax.f32 %v854, 0.0
    %v863 = vpack.c.bf16 %v856, %v855
    %v864 = vpack.c.bf16 %v858, %v857
    %v865 = vpack.c.bf16 %v860, %v859
    %v866 = vpack.c.bf16 %v862, %v861
    %v867 = vld [vmem:[%s8] sm:$0xf]
    %v868 = vld [vmem:[%s8 + $0x4] sm:$0xf]
    %v869 = vld [vmem:[%s8 + $0x8] sm:$0xf]
    %v870 = vld [vmem:[%s8 + $0xc] sm:$0xf]
    %v871 = vld [vmem:[%s8 + $0x10] sm:$0xf]
    %v872 = vld [vmem:[%s8 + $0x14] sm:$0xf]
    %v873 = vld [vmem:[%s8 + $0x18] sm:$0xf]
    %v874 = vld [vmem:[%s8 + $0x1c] sm:$0xf]
    %v875 = vld [vmem:[%s8 + $0x20] sm:$0xf]
    %v876 = vld [vmem:[%s8 + $0x24] sm:$0xf]
    %v877 = vld [vmem:[%s8 + $0x28] sm:$0xf]
    %v878 = vld [vmem:[%s8 + $0x2c] sm:$0xf]
    %v879 = vld [vmem:[%s8 + $0x30] sm:$0xf]
    %v880 = vld [vmem:[%s8 + $0x34] sm:$0xf]
    %v881 = vld [vmem:[%s8 + $0x38] sm:$0xf]
    %v882 = vld [vmem:[%s8 + $0x3c] sm:$0xf]
    %v883 = vld [vmem:[%s9] sm:$0x1]
    %v885 = vlaneseq
    %v886 = vshrl.u32 %v885, 7
    %v887 = vsub.s32 0, %v886
    %v888 = vrot.slane %v883, %v887
    %v906 = vunpack.c.l.b16 %v867
    %v907 = vunpack.c.l.b16 %v868
    %v908 = vunpack.c.l.b16 %v869
    %v909 = vunpack.c.l.b16 %v870
    %v910 = vunpack.c.l.b16 %v871
    %v911 = vunpack.c.l.b16 %v872
    %v912 = vunpack.c.l.b16 %v873
    %v913 = vunpack.c.l.b16 %v874
    %v914 = vunpack.c.l.b16 %v875
    %v915 = vunpack.c.l.b16 %v876
    %v916 = vunpack.c.l.b16 %v877
    %v917 = vunpack.c.l.b16 %v878
    %v918 = vunpack.c.l.b16 %v879
    %v919 = vunpack.c.l.b16 %v880
    %v920 = vunpack.c.l.b16 %v881
    %v921 = vunpack.c.l.b16 %v882
    %v922 = vpack.c.b16 %v907, %v906
    %v923 = vpack.c.b16 %v909, %v908
    %v924 = vpack.c.b16 %v911, %v910
    %v925 = vpack.c.b16 %v913, %v912
    %v926 = vpack.c.b16 %v915, %v914
    %v927 = vpack.c.b16 %v917, %v916
    %v928 = vpack.c.b16 %v919, %v918
    %v929 = vpack.c.b16 %v921, %v920
    %938 = vmatprep.subr.bf16.mxu0 0
    %939 = vmatpush1.bf16.msra.mxu0 %v929
    %940 = vmatprep.subr.bf16.mxu0 0
    %941 = vmatpush1.bf16.msra.mxu0 %v928
    %942 = vmatprep.subr.bf16.mxu0 0
    %943 = vmatpush1.bf16.msra.mxu0 %v927
    %944 = vmatprep.subr.bf16.mxu0 0
    %945 = vmatpush1.bf16.msra.mxu0 %v926
    %946 = vmatprep.subr.bf16.mxu0 0
    %947 = vmatpush1.bf16.msra.mxu0 %v925
    %948 = vmatprep.subr.bf16.mxu0 0
    %949 = vmatpush1.bf16.msra.mxu0 %v924
    %950 = vmatprep.subr.bf16.mxu0 0
    %951 = vmatpush1.bf16.msra.mxu0 %v923
    %952 = vmatprep.subr.bf16.mxu0 0
    %953 = vmatpush1.bf16.msra.mxu0 %v922
    %954 = vmatprep.subr.bf16.mxu0 0
    %955 = vmatpush2.bf16.msra.mxu0 0
    %956 = vmatprep.subr.bf16.mxu0 0
    %957 = vmatpush2.bf16.msra.mxu0 0
    %958 = vmatprep.subr.bf16.mxu0 0
    %959 = vmatpush2.bf16.msra.mxu0 0
    %960 = vmatprep.subr.bf16.mxu0 0
    %961 = vmatpush2.bf16.msra.mxu0 0
    %962 = vmatprep.subr.bf16.mxu0 0
    %963 = vmatpush2.bf16.msra.mxu0 0
    %964 = vmatprep.subr.bf16.mxu0 0
    %965 = vmatpush2.bf16.msra.mxu0 0
    %966 = vmatprep.subr.bf16.mxu0 0
    %967 = vmatpush2.bf16.msra.mxu0 0
    %968 = vmatprep.subr.bf16.mxu0 0
    %969 = vmatpush2.bf16.msra.mxu0 0
    %970 = vmatprep.mubr.bf16.mxu0 0
    %971 = vmatmul.mubr.bf16.gmra.mxu0 %v863
    %v972 = vpop.f32.mrf.mxu0
    %v973 = vadd.f32 %v888, %v972
    %v974 = vpop.f32.mrf.mxu0
    %v975 = vpop.f32.mrf.mxu0
    %v976 = vadd.f32 %v888, %v975
    %v977 = vpop.f32.mrf.mxu0
    %978 = vmatprep.mubr.bf16.mxu0 0
    %979 = vmatmul.mubr.bf16.gmra.mxu0 %v864
    %v980 = vpop.f32.mrf.mxu0
    %v981 = vadd.f32 %v888, %v980
    %v982 = vpop.f32.mrf.mxu0
    %v983 = vpop.f32.mrf.mxu0
    %v984 = vadd.f32 %v888, %v983
    %v985 = vpop.f32.mrf.mxu0
    %986 = vmatprep.mubr.bf16.mxu0 0
    %987 = vmatmul.mubr.bf16.gmra.mxu0 %v865
    %v988 = vpop.f32.mrf.mxu0
    %v989 = vadd.f32 %v888, %v988
    %v990 = vpop.f32.mrf.mxu0
    %v991 = vpop.f32.mrf.mxu0
    %v992 = vadd.f32 %v888, %v991
    %v993 = vpop.f32.mrf.mxu0
    %994 = vmatprep.mubr.bf16.mxu0 0
    %995 = vmatmul.mubr.bf16.gmra.mxu0 %v866
    %v996 = vpop.f32.mrf.mxu0
    %v997 = vadd.f32 %v888, %v996
    %v998 = vpop.f32.mrf.mxu0
    %v999 = vpop.f32.mrf.mxu0
    %v1000 = vadd.f32 %v888, %v999
    %v1001 = vpop.f32.mrf.mxu0
    %1002 = vdwg.mxu0
    %v1003 = vrot.slane %v973, 4
    %v1004 = vmax.f32 %v973, %v1003
    %v1005 = vrot.slane %v1004, 2
    %v1006 = vmax.f32 %v1004, %v1005
    %v1007 = vrot.slane %v1006, 1
    %v1008 = vmax.f32 %v1006, %v1007
    %v1009 = vrot.slane %v976, 4
    %v1010 = vmax.f32 %v976, %v1009
    %v1011 = vrot.slane %v1010, 2
    %v1012 = vmax.f32 %v1010, %v1011
    %v1013 = vrot.slane %v1012, 1
    %v1014 = vmax.f32 %v1012, %v1013
    %v1015 = vrot.slane %v981, 4
    %v1016 = vmax.f32 %v981, %v1015
    %v1017 = vrot.slane %v1016, 2
    %v1018 = vmax.f32 %v1016, %v1017
    %v1019 = vrot.slane %v1018, 1
    %v1020 = vmax.f32 %v1018, %v1019
    %v1021 = vrot.slane %v984, 4
    %v1022 = vmax.f32 %v984, %v1021
    %v1023 = vrot.slane %v1022, 2
    %v1024 = vmax.f32 %v1022, %v1023
    %v1025 = vrot.slane %v1024, 1
    %v1026 = vmax.f32 %v1024, %v1025
    %v1027 = vrot.slane %v989, 4
    %v1028 = vmax.f32 %v989, %v1027
    %v1029 = vrot.slane %v1028, 2
    %v1030 = vmax.f32 %v1028, %v1029
    %v1031 = vrot.slane %v1030, 1
    %v1032 = vmax.f32 %v1030, %v1031
    %v1033 = vrot.slane %v992, 4
    %v1034 = vmax.f32 %v992, %v1033
    %v1035 = vrot.slane %v1034, 2
    %v1036 = vmax.f32 %v1034, %v1035
    %v1037 = vrot.slane %v1036, 1
    %v1038 = vmax.f32 %v1036, %v1037
    %v1039 = vrot.slane %v997, 4
    %v1040 = vmax.f32 %v997, %v1039
    %v1041 = vrot.slane %v1040, 2
    %v1042 = vmax.f32 %v1040, %v1041
    %v1043 = vrot.slane %v1042, 1
    %v1044 = vmax.f32 %v1042, %v1043
    %v1045 = vrot.slane %v1000, 4
    %v1046 = vmax.f32 %v1000, %v1045
    %v1047 = vrot.slane %v1046, 2
    %v1048 = vmax.f32 %v1046, %v1047
    %v1049 = vrot.slane %v1048, 1
    %v1050 = vmax.f32 %v1048, %v1049
    %v1059 = vsel %vm638, %v1014, %v1008
    %v1060 = vsel %vm640, %v1020, %v1059
    %v1061 = vsel %vm642, %v1026, %v1060
    %v1062 = vsel %vm644, %v1032, %v1061
    %v1063 = vsel %vm646, %v1038, %v1062
    %v1064 = vsel %vm648, %v1044, %v1063
    %v1065 = vsel %vm650, %v1050, %v1064
    %1067 = vst [vmem:[#allocation2] sm:$0xff] %v1065
    // Predicated region
    $region42: #{group_encoder_forward.1} parent=1 // pred_check
      _
    $region43: #{group_encoder_forward.1} parent=1 // pred_check_branch
      %1069 = sbr.rel (0) target = $region45
    $region44: #{group_encoder_forward.1} parent=1 // pred_region
      %s1071 = ssub.s32 128, 128
      %1072 = vsyncadd [#allocation3], %s1071
      %s1074 = sshll.u32 [#allocation2], 4
      %s1075 = int_to_ptr.vmem [resolvable:$true] %s1074
      %1077 = dma.vmem_to_hbm [thread:$0]  %s1075, 128, %s10, [#allocation3]
    $region45: #{group_encoder_forward.1} parent=1 // pred_fallthru
      _
    // Predicated region
    $region46: #{group_encoder_forward.1} parent=1 // pred_check
      _
    $region47: #{group_encoder_forward.1} parent=1 // pred_check_branch
      %1079 = sbr.rel (0) target = $region49
    $region48: #{group_encoder_forward.1} parent=1 // pred_region
      %1080 = dma.done [#allocation3], 128
    $region49: #{group_encoder_forward.1} parent=1 // pred_fallthru
      _
    %1081 = vsyncpa [#allocation3], 1

</llo_original>
